<compile_context>
chip_gen: v7x
topology: tpu7x:2x2x1
jax: 0.10.0
libtpu: 0.0.40
codegen_flags: <defaults>
</compile_context>

<pallas_src>
import jax
import jax.numpy as jnp
from jax.experimental import pallas as pl
from jax.experimental.pallas import tpu as pltpu


def _round_up(x, m):
    return (x + m - 1) // m * m


def wide_and_deep_kernel(x_ref, e1t_ref, b1_ref, w2t_ref, b2_ref,
                         woh_ref, wv_ref, bo_ref, out_ref):
    # x arrives features-major and bf16: (N, TB), lane-dense, no in-kernel transpose.
    x_t = x_ref[...]                                                     # (N, TB) bf16

    # Deep path: (embedding fused into fc1) -> relu -> fc2 -> relu.  bf16 operands, f32 acc.
    h = jnp.dot(e1t_ref[...], x_t,
                preferred_element_type=jnp.float32) + b1_ref[...]        # (F1, TB) f32
    h = jnp.maximum(h, 0.0)
    h = jnp.dot(w2t_ref[...], h.astype(jnp.bfloat16),
                preferred_element_type=jnp.float32) + b2_ref[...]        # (F2, TB) f32
    h = jnp.maximum(h, 0.0)

    # Output layer on concat([h, wide]):  h . wo_h  +  x . (E_wide @ wo_wide)  +  bo
    # VPU multiplies + sublane reductions -> lane-dense (1, TB) row (unmasked store).
    y = (jnp.sum(h * woh_ref[...], axis=0, keepdims=True)
         + jnp.sum(x_t.astype(jnp.float32) * wv_ref[...], axis=0, keepdims=True)
         + bo_ref[0, 0])                                                 # (1, TB) f32
    out_ref[...] = y


def wide_and_deep_forward(items, kp, *, tile_b=2048):
    """items: (B, n_items) float32 (multi-hot).  kp: dict from prepare_kernel_params."""
    B, N = items.shape
    F1, F2 = kp["e1t"].shape[0], kp["w2t"].shape[0]

    # Lane-align the batch tile (multiple of 256); don't over-pad tiny batches.
    tile_b = max(256, min(_round_up(tile_b, 256), _round_up(B, 256)))
    # Keep >= 2 grid steps when the batch allows it (v7x: two TCs share the parallel axis).
    if _round_up(B, 256) >= 512 and _round_up(B, tile_b) // tile_b < 2:
        tile_b = max(256, _round_up(_round_up(B, 256) // 2, 256))
    B_pad = _round_up(B, tile_b)
    grid = (B_pad // tile_b,)

    # Single fused relayout pass: f32 -> bf16 cast, transpose to features-major, pad the tail.
    # TODO(synk): in production, produce items already as (n_items, B) bf16 upstream so this
    # wrapper relayout disappears entirely.
    x_t = jnp.pad(items.astype(jnp.bfloat16).T, ((0, 0), (0, B_pad - B)))   # (N, B_pad)

    const = lambda a: pl.BlockSpec(a.shape, lambda i: (0, 0))
    flops = 2 * B_pad * (N * F1 + F1 * F2 + F2 + N)
    bytes_accessed = (2 * B_pad * N + 4 * B_pad
                      + 2 * (kp["e1t"].size + kp["w2t"].size)
                      + 4 * (kp["b1"].size + kp["b2"].size + kp["woh"].size
                             + kp["wv"].size + kp["bo"].size))

    out = pl.pallas_call(
        wide_and_deep_kernel,
        out_shape=jax.ShapeDtypeStruct((1, B_pad), jnp.float32),
        grid=grid,
        in_specs=[
            pl.BlockSpec((N, tile_b), lambda i: (0, i)),        # x tile: features-major, bf16
            const(kp["e1t"]), const(kp["b1"]),                  # fused emb@W1 (bf16), b1
            const(kp["w2t"]), const(kp["b2"]),                  # W2^T (bf16), b2
            const(kp["woh"]), const(kp["wv"]),                  # output weights (f32 columns)
            pl.BlockSpec(memory_space=pltpu.MemorySpace.SMEM),  # bo scalar in SMEM
        ],
        out_specs=pl.BlockSpec((1, tile_b), lambda i: (0, i)),  # lane-dense output row
        compiler_params=pltpu.CompilerParams(
            dimension_semantics=("parallel",),
            vmem_limit_bytes=32 * 1024 * 1024),                 # v5e default is only 16 MiB
        cost_estimate=pl.CostEstimate(
            flops=int(flops), transcendentals=0, bytes_accessed=int(bytes_accessed)),
    )(x_t, kp["e1t"], kp["b1"], kp["w2t"], kp["b2"], kp["woh"], kp["wv"], kp["bo"])

    return out.reshape(B_pad, 1)[:B]


def wide_and_deep_model(x, kp, x_c=None, x_s=None, *, tile_b=2048):
    """Mirrors WideAndDeepPretrained.forward (optional x_c / x_s set inputs)."""
    y = wide_and_deep_forward(x, kp, tile_b=tile_b)
    if x_c is not None and x_s is not None:
        y_c = wide_and_deep_forward(x_c, kp, tile_b=tile_b)
        y_s = wide_and_deep_forward(x_s, kp, tile_b=tile_b)
        return y, jnp.squeeze(y_c), jnp.squeeze(y_s)
    return y


def init_params(key, n_items, h_dim, wide_dim, fc1, fc2):
    """Deterministic synthetic parameters; Linear weights in (in, out) layout."""
    ks = jax.random.split(key, 8)

    def unif(k, shape, fan_in):
        bound = 1.0 / jnp.sqrt(fan_in)
        return jax.random.uniform(k, shape, jnp.float32, -bound, bound)

    emb = jax.random.normal(ks[0], (n_items, h_dim), jnp.float32)      # deep EmbeddingGrad
    wide = jax.random.normal(ks[1], (n_items, wide_dim), jnp.float32)  # pretrained wide table
    w1 = unif(ks[2], (h_dim, fc1), h_dim)
    b1 = unif(ks[3], (fc1,), h_dim)
    w2 = unif(ks[4], (fc1, fc2), fc1)
    b2 = unif(ks[5], (fc2,), fc1)
    # output_layer: Linear(wide_dim + fc2, 1); concat order is [h (fc2), wide (wide_dim)]
    wo = unif(ks[6], (fc2 + wide_dim, 1), fc2 + wide_dim)
    bo = unif(ks[7], (1, 1), fc2 + wide_dim)
    return dict(emb=emb, wide=wide, w1=w1, b1=b1, w2=w2, b2=b2, wo=wo, bo=bo)


def prepare_kernel_params(p):
    """One-time (pretrained-weight) fusion + layout/dtype prep for the kernel."""
    fc2 = p["w2"].shape[1]
    e1t = (p["emb"] @ p["w1"]).T.astype(jnp.bfloat16)        # (F1, N)  fused emb -> fc1
    w2t = p["w2"].T.astype(jnp.bfloat16)                     # (F2, F1)
    b1 = p["b1"].reshape(-1, 1).astype(jnp.float32)          # (F1, 1)
    b2 = p["b2"].reshape(-1, 1).astype(jnp.float32)          # (F2, 1)
    woh = p["wo"][:fc2, :].astype(jnp.float32)               # (F2, 1)
    wv = (p["wide"] @ p["wo"][fc2:, :]).astype(jnp.float32)  # (N, 1)  wide emb folded in
    bo = p["bo"].reshape(1, 1).astype(jnp.float32)           # (1, 1)  -> SMEM
    return dict(e1t=e1t, w2t=w2t, b1=b1, b2=b2, woh=woh, wv=wv, bo=bo)


def reference_forward(x, p):
    """Exact module semantics in f32 (PyTorch op order)."""
    h = x @ p["emb"]
    h = jnp.maximum(h @ p["w1"] + p["b1"], 0.0)
    h = jnp.maximum(h @ p["w2"] + p["b2"], 0.0)
    wide = x @ p["wide"]
    cat = jnp.concatenate([h, wide], axis=-1)
    return cat @ p["wo"] + p["bo"]


def reference_forward_matched(x, kp):
    """Same fusion + bf16 casts (including bf16 x) as the kernel (tight numerical check)."""
    xb = x.astype(jnp.bfloat16)
    h = jnp.dot(xb, kp["e1t"].T,
                preferred_element_type=jnp.float32) + kp["b1"].reshape(1, -1)
    h = jnp.maximum(h, 0.0)
    h = jnp.dot(h.astype(jnp.bfloat16), kp["w2t"].T,
                preferred_element_type=jnp.float32) + kp["b2"].reshape(1, -1)
    h = jnp.maximum(h, 0.0)
    return (jnp.sum(h * kp["woh"].T, axis=-1, keepdims=True)
            + jnp.sum(xb.astype(jnp.float32) * kp["wv"].T, axis=-1, keepdims=True)
            + kp["bo"])


if __name__ == "__main__":
    # Small shapes consistent with the module:
    # WideAndDeepPretrained(n_items=16, h_dim_size=32, wide=<16x16 pretrained>, wide_dim=16)
    N_ITEMS, H_DIM, WIDE_DIM, FC1, FC2 = 16, 32, 16, 64, 32

    key = jax.random.PRNGKey(0)
    k_small, k_mid, k_large, k_params = jax.random.split(key, 4)
    params = init_params(k_params, N_ITEMS, H_DIM, WIDE_DIM, FC1, FC2)
    kparams = prepare_kernel_params(params)

    fwd = jax.jit(wide_and_deep_forward)   # fuses the cast/transpose/pad around the kernel

    def run_and_check(items):
        y = jax.block_until_ready(fwd(items, kparams))
        assert y.shape == (items.shape[0], 1)
        y_matched = reference_forward_matched(items, kparams)
        y_exact = reference_forward(items, params)
        assert jnp.allclose(y, y_matched, atol=2e-3, rtol=2e-3), \
            "mismatch vs matched-precision reference"
        assert jnp.allclose(y, y_exact, atol=1e-1, rtol=1e-1), \
            "mismatch vs f32 module reference"
        return y

    # Note: the bf16 cast of x (and the fused bf16 emb@W1 table) is exact for 0/1 multi-hot
    # inputs (the module's intended semantics); the real-valued demo inputs below are only
    # used to exercise the numeric tolerance bands.
    run_and_check(jax.random.uniform(k_small, (16, N_ITEMS), jnp.float32))    # single step
    run_and_check(jax.random.uniform(k_mid, (500, N_ITEMS), jnp.float32))     # tile clamp -> 2 steps
    run_and_check(jax.random.uniform(k_large, (2500, N_ITEMS), jnp.float32))  # tile_b=2048, 2 steps

    print("KERNEL_OK")
</pallas_src>

<mosaic_0001>
module attributes {stable_mosaic.version = 11 : i64} {
  func.func @wide_and_deep_kernel(%arg0: i32, %arg1: memref<16x256xbf16, #tpu.memory_space<vmem>>, %arg2: memref<64x16xbf16, #tpu.memory_space<vmem>>, %arg3: memref<64x1xf32, #tpu.memory_space<vmem>>, %arg4: memref<32x64xbf16, #tpu.memory_space<vmem>>, %arg5: memref<32x1xf32, #tpu.memory_space<vmem>>, %arg6: memref<32x1xf32, #tpu.memory_space<vmem>>, %arg7: memref<16x1xf32, #tpu.memory_space<vmem>>, %arg8: memref<1x1xf32, #tpu.memory_space<smem>>, %arg9: memref<1x256xf32, #tpu.memory_space<vmem>>) attributes {dimension_semantics = [#tpu.dimension_semantics<parallel>], iteration_bounds = array<i64: 1>, scalar_prefetch = 0 : i64, scratch_operands = 0 : i64, tpu.core_type = #tpu.core_type<tc>, window_params = [{transform_indices = @transform_0, window_bounds = array<i64: 16, 256>}, {pipeline_mode = #tpu.pipeline_mode<synchronous>, transform_indices = @transform_1, window_bounds = array<i64: 64, 16>}, {pipeline_mode = #tpu.pipeline_mode<synchronous>, transform_indices = @transform_2, window_bounds = array<i64: 64, 1>}, {pipeline_mode = #tpu.pipeline_mode<synchronous>, transform_indices = @transform_3, window_bounds = array<i64: 32, 64>}, {pipeline_mode = #tpu.pipeline_mode<synchronous>, transform_indices = @transform_4, window_bounds = array<i64: 32, 1>}, {pipeline_mode = #tpu.pipeline_mode<synchronous>, transform_indices = @transform_5, window_bounds = array<i64: 32, 1>}, {pipeline_mode = #tpu.pipeline_mode<synchronous>, transform_indices = @transform_6, window_bounds = array<i64: 16, 1>}, {transform_indices = @transform_7, window_bounds = array<i64: 1, 1>}, {transform_indices = @transform_8, window_bounds = array<i64: 1, 256>}]} {
    %c0 = arith.constant 0 : index
    %c0_0 = arith.constant 0 : index
    %0 = vector.load %arg1[%c0, %c0_0] : memref<16x256xbf16, #tpu.memory_space<vmem>>, vector<16x256xbf16>
    %c0_1 = arith.constant 0 : index
    %c0_2 = arith.constant 0 : index
    %1 = vector.load %arg2[%c0_1, %c0_2] : memref<64x16xbf16, #tpu.memory_space<vmem>>, vector<64x16xbf16>
    %cst = arith.constant dense<0.000000e+00> : vector<64x256xf32>
    %2 = tpu.matmul %1, %0, %cst {dimension_numbers = #tpu.dot_dimension_numbers<[1], [0], [0], [1], [0, 0, 1, 1], [], []>} : vector<64x16xbf16>, vector<16x256xbf16>, vector<64x256xf32> -> vector<64x256xf32>
    %c0_3 = arith.constant 0 : index
    %c0_4 = arith.constant 0 : index
    %3 = vector.load %arg3[%c0_3, %c0_4] : memref<64x1xf32, #tpu.memory_space<vmem>>, vector<64x1xf32>
    %4 = vector.broadcast %3 : vector<64x1xf32> to vector<64x256xf32>
    %5 = arith.addf %2, %4 : vector<64x256xf32>
    %cst_5 = arith.constant 0.000000e+00 : f32
    %6 = vector.broadcast %cst_5 : f32 to vector<64x256xf32>
    %7 = arith.maximumf %5, %6 : vector<64x256xf32>
    %c0_6 = arith.constant 0 : index
    %c0_7 = arith.constant 0 : index
    %8 = vector.load %arg4[%c0_6, %c0_7] : memref<32x64xbf16, #tpu.memory_space<vmem>>, vector<32x64xbf16>
    %9 = arith.truncf %7 : vector<64x256xf32> to vector<64x256xbf16>
    %cst_8 = arith.constant dense<0.000000e+00> : vector<32x256xf32>
    %10 = tpu.matmul %8, %9, %cst_8 {dimension_numbers = #tpu.dot_dimension_numbers<[1], [0], [0], [1], [0, 0, 1, 1], [], []>} : vector<32x64xbf16>, vector<64x256xbf16>, vector<32x256xf32> -> vector<32x256xf32>
    %c0_9 = arith.constant 0 : index
    %c0_10 = arith.constant 0 : index
    %11 = vector.load %arg5[%c0_9, %c0_10] : memref<32x1xf32, #tpu.memory_space<vmem>>, vector<32x1xf32>
    %12 = vector.broadcast %11 : vector<32x1xf32> to vector<32x256xf32>
    %13 = arith.addf %10, %12 : vector<32x256xf32>
    %cst_11 = arith.constant 0.000000e+00 : f32
    %14 = vector.broadcast %cst_11 : f32 to vector<32x256xf32>
    %15 = arith.maximumf %13, %14 : vector<32x256xf32>
    %c0_12 = arith.constant 0 : index
    %c0_13 = arith.constant 0 : index
    %16 = vector.load %arg6[%c0_12, %c0_13] : memref<32x1xf32, #tpu.memory_space<vmem>>, vector<32x1xf32>
    %17 = vector.broadcast %16 : vector<32x1xf32> to vector<32x256xf32>
    %18 = arith.mulf %15, %17 : vector<32x256xf32>
    %cst_14 = arith.constant dense<0.000000e+00> : vector<256xf32>
    %19 = vector.multi_reduction <add>, %18, %cst_14 [0] : vector<32x256xf32> to vector<256xf32>
    %20 = vector.shape_cast %19 : vector<256xf32> to vector<1x256xf32>
    %21 = arith.extf %0 : vector<16x256xbf16> to vector<16x256xf32>
    %c0_15 = arith.constant 0 : index
    %c0_16 = arith.constant 0 : index
    %22 = vector.load %arg7[%c0_15, %c0_16] : memref<16x1xf32, #tpu.memory_space<vmem>>, vector<16x1xf32>
    %23 = vector.broadcast %22 : vector<16x1xf32> to vector<16x256xf32>
    %24 = arith.mulf %21, %23 : vector<16x256xf32>
    %cst_17 = arith.constant dense<0.000000e+00> : vector<256xf32>
    %25 = vector.multi_reduction <add>, %24, %cst_17 [0] : vector<16x256xf32> to vector<256xf32>
    %26 = vector.shape_cast %25 : vector<256xf32> to vector<1x256xf32>
    %27 = arith.addf %20, %26 : vector<1x256xf32>
    %c0_18 = arith.constant 0 : index
    %c0_19 = arith.constant 0 : index
    %28 = memref.load %arg8[%c0_18, %c0_19] : memref<1x1xf32, #tpu.memory_space<smem>>
    %29 = vector.broadcast %28 : f32 to vector<1x256xf32>
    %30 = arith.addf %27, %29 : vector<1x256xf32>
    %c0_20 = arith.constant 0 : index
    %c0_21 = arith.constant 0 : index
    %31 = vector.load %arg9[%c0_20, %c0_21] : memref<1x256xf32, #tpu.memory_space<vmem>>, vector<1x256xf32>
    tpu.vector_store %arg9[%c0_20, %c0_21], %30 {strides = array<i32>} : memref<1x256xf32, #tpu.memory_space<vmem>>, vector<1x256xf32>,
    return
  }
  func.func @transform_0(%arg0: i32) -> (i32, i32) {
    %c0_i32 = arith.constant 0 : i32
    %c0_i32_0 = arith.constant 0 : i32
    return %c0_i32, %arg0 : i32, i32
  }
  func.func @transform_1(%arg0: i32) -> (i32, i32) {
    %c0_i32 = arith.constant 0 : i32
    %c0_i32_0 = arith.constant 0 : i32
    %c0_i32_1 = arith.constant 0 : i32
    return %c0_i32, %c0_i32_0 : i32, i32
  }
  func.func @transform_2(%arg0: i32) -> (i32, i32) {
    %c0_i32 = arith.constant 0 : i32
    %c0_i32_0 = arith.constant 0 : i32
    %c0_i32_1 = arith.constant 0 : i32
    return %c0_i32, %c0_i32_0 : i32, i32
  }
  func.func @transform_3(%arg0: i32) -> (i32, i32) {
    %c0_i32 = arith.constant 0 : i32
    %c0_i32_0 = arith.constant 0 : i32
    %c0_i32_1 = arith.constant 0 : i32
    return %c0_i32, %c0_i32_0 : i32, i32
  }
  func.func @transform_4(%arg0: i32) -> (i32, i32) {
    %c0_i32 = arith.constant 0 : i32
    %c0_i32_0 = arith.constant 0 : i32
    %c0_i32_1 = arith.constant 0 : i32
    return %c0_i32, %c0_i32_0 : i32, i32
  }
  func.func @transform_5(%arg0: i32) -> (i32, i32) {
    %c0_i32 = arith.constant 0 : i32
    %c0_i32_0 = arith.constant 0 : i32
    %c0_i32_1 = arith.constant 0 : i32
    return %c0_i32, %c0_i32_0 : i32, i32
  }
  func.func @transform_6(%arg0: i32) -> (i32, i32) {
    %c0_i32 = arith.constant 0 : i32
    %c0_i32_0 = arith.constant 0 : i32
    %c0_i32_1 = arith.constant 0 : i32
    return %c0_i32, %c0_i32_0 : i32, i32
  }
  func.func @transform_7(%arg0: i32) -> (i32, i32) {
    %c0_i32 = arith.constant 0 : i32
    %c0_i32_0 = arith.constant 0 : i32
    %c0_i32_1 = arith.constant 0 : i32
    return %c0_i32, %c0_i32_0 : i32, i32
  }
  func.func @transform_8(%arg0: i32) -> (i32, i32) {
    %c0_i32 = arith.constant 0 : i32
    %c0_i32_0 = arith.constant 0 : i32
    return %c0_i32, %arg0 : i32, i32
  }
}

</mosaic_0001>

<llo_original>
// kernel: wide_and_deep_forward.1
$region0: #{wide_and_deep_forward.1}
  #allocation0 [shape = 'u32[]', space=smem, size = 0x4, offset = 0x4, fixed_abs, tag = 'smem constant byte address 0x4 - core index']
  #allocation1 [shape = 'u32[144,128]{1,0:T(1,128)}', space=vmem, size = 0x12000, scoped, tag = 'internal scratch']
  #allocation2 [shape = 'f32[1,1]{1,0:T(1,128)S(6)}', space=smem, size = 0x200, scoped, tag = 'scoped memory for wide_and_deep_forward.1']
  %s0 = inlined_call_operand.vmem [shape: bf16[16,256], index: 0, kind: input, shape index: {}]
  %s1 = inlined_call_operand.vmem [shape: bf16[64,16], index: 1, kind: input, shape index: {}]
  %s2 = inlined_call_operand.vmem [shape: f32[64,1], index: 2, kind: input, shape index: {}]
  %s3 = inlined_call_operand.vmem [shape: bf16[32,64], index: 3, kind: input, shape index: {}]
  %s4 = inlined_call_operand.vmem [shape: f32[32,1], index: 4, kind: input, shape index: {}]
  %s5 = inlined_call_operand.vmem [shape: f32[32,1], index: 5, kind: input, shape index: {}]
  %s6 = inlined_call_operand.vmem [shape: f32[16,1], index: 6, kind: input, shape index: {}]
  %s7 = inlined_call_operand.<no memory space> [shape: f32[1,1], index: 7, kind: input, shape index: {}]
  %s8 = inlined_call_operand.vmem [shape: f32[1,256], index: 8, kind: output, shape index: {}]
  %s9 = sld [smem:[#allocation0]]
  $region42: #{wide_and_deep_forward.1} parent=0
    _
  %s11 = ssub.s32 1, %s9
  %s12 = scalar_select 0, %s11, %s9
  %13 = sst [smem:[#allocation2]] %s7
  // Predicated region
  $region2: #{wide_and_deep_forward.1} parent=0 // pred_check
    _
  $region3: #{wide_and_deep_forward.1} parent=0 // pred_check_branch
    %15 = sbr.rel (0) target = $region5
  $region4: #{wide_and_deep_forward.1} parent=0 // pred_region
    _
  $region5: #{wide_and_deep_forward.1} parent=0 // pred_fallthru
    _
  // Predicated region
  $region6: #{wide_and_deep_forward.1} parent=0 // pred_check
    _
  $region7: #{wide_and_deep_forward.1} parent=0 // pred_check_branch
    %17 = sbr.rel (0) target = $region9
  $region8: #{wide_and_deep_forward.1} parent=0 // pred_region
    _
  $region9: #{wide_and_deep_forward.1} parent=0 // pred_fallthru
    _
  // Predicated region
  $region10: #{wide_and_deep_forward.1} parent=0 // pred_check
    _
  $region11: #{wide_and_deep_forward.1} parent=0 // pred_check_branch
    %19 = sbr.rel (0) target = $region13
  $region12: #{wide_and_deep_forward.1} parent=0 // pred_region
    _
  $region13: #{wide_and_deep_forward.1} parent=0 // pred_fallthru
    _
  // Predicated region
  $region14: #{wide_and_deep_forward.1} parent=0 // pred_check
    _
  $region15: #{wide_and_deep_forward.1} parent=0 // pred_check_branch
    %21 = sbr.rel (0) target = $region17
  $region16: #{wide_and_deep_forward.1} parent=0 // pred_region
    _
  $region17: #{wide_and_deep_forward.1} parent=0 // pred_fallthru
    _
  // Predicated region
  $region18: #{wide_and_deep_forward.1} parent=0 // pred_check
    _
  $region19: #{wide_and_deep_forward.1} parent=0 // pred_check_branch
    %23 = sbr.rel (0) target = $region21
  $region20: #{wide_and_deep_forward.1} parent=0 // pred_region
    _
  $region21: #{wide_and_deep_forward.1} parent=0 // pred_fallthru
    _
  // Predicated region
  $region22: #{wide_and_deep_forward.1} parent=0 // pred_check
    _
  $region23: #{wide_and_deep_forward.1} parent=0 // pred_check_branch
    %25 = sbr.rel (0) target = $region25
  $region24: #{wide_and_deep_forward.1} parent=0 // pred_region
    _
  $region25: #{wide_and_deep_forward.1} parent=0 // pred_fallthru
    _
  // Predicated region
  $region26: #{wide_and_deep_forward.1} parent=0 // pred_check
    _
  $region27: #{wide_and_deep_forward.1} parent=0 // pred_check_branch
    %27 = sbr.rel (0) target = $region29
  $region28: #{wide_and_deep_forward.1} parent=0 // pred_region
    _
  $region29: #{wide_and_deep_forward.1} parent=0 // pred_fallthru
    _
  // Predicated region
  $region30: #{wide_and_deep_forward.1} parent=0 // pred_check
    _
  $region31: #{wide_and_deep_forward.1} parent=0 // pred_check_branch
    %29 = sbr.rel (0) target = $region33
  $region32: #{wide_and_deep_forward.1} parent=0 // pred_region
    _
  $region33: #{wide_and_deep_forward.1} parent=0 // pred_fallthru
    _
  %v31 = vld [vmem:[%s0] sm:$0xff]
  %v32 = vld [vmem:[%s0 + $0x8] sm:$0xff]
  %v33 = vld [vmem:[%s1] sm:$0xf]
  %v34 = vld [vmem:[%s1 + $0x4] sm:$0xf]
  %v35 = vld [vmem:[%s1 + $0x8] sm:$0xf]
  %v36 = vld [vmem:[%s1 + $0xc] sm:$0xf]
  %v37 = vld [vmem:[%s1 + $0x10] sm:$0xf]
  %v38 = vld [vmem:[%s1 + $0x14] sm:$0xf]
  %v39 = vld [vmem:[%s1 + $0x18] sm:$0xf]
  %v40 = vld [vmem:[%s1 + $0x1c] sm:$0xf]
  %v41 = vld [vmem:[%s2] sm:$0xff]
  %v42 = vld [vmem:[%s2 + $0x8] sm:$0xff]
  %v43 = vld [vmem:[%s2 + $0x10] sm:$0xff]
  %v44 = vld [vmem:[%s2 + $0x18] sm:$0xff]
  %v45 = vld [vmem:[%s2 + $0x20] sm:$0xff]
  %v46 = vld [vmem:[%s2 + $0x28] sm:$0xff]
  %v47 = vld [vmem:[%s2 + $0x30] sm:$0xff]
  %v48 = vld [vmem:[%s2 + $0x38] sm:$0xff]
  %50 = vset.pattern.permute.xlu0 0
  %51 = vperm.xlu0 %50, %v41
  %v52 = vpop.permute.xlu0 %51
  %55 = vset.pattern.permute.xlu0 0
  %56 = vperm.xlu0 %55, %v42
  %v57 = vpop.permute.xlu0 %56
  %60 = vset.pattern.permute.xlu0 0
  %61 = vperm.xlu0 %60, %v43
  %v62 = vpop.permute.xlu0 %61
  %65 = vset.pattern.permute.xlu0 0
  %66 = vperm.xlu0 %65, %v44
  %v67 = vpop.permute.xlu0 %66
  %70 = vset.pattern.permute.xlu0 0
  %71 = vperm.xlu0 %70, %v45
  %v72 = vpop.permute.xlu0 %71
  %75 = vset.pattern.permute.xlu0 0
  %76 = vperm.xlu0 %75, %v46
  %v77 = vpop.permute.xlu0 %76
  %80 = vset.pattern.permute.xlu0 0
  %81 = vperm.xlu0 %80, %v47
  %v82 = vpop.permute.xlu0 %81
  %85 = vset.pattern.permute.xlu0 0
  %86 = vperm.xlu0 %85, %v48
  %v87 = vpop.permute.xlu0 %86
  %v97 = vunpack.c.l.b16 %v33
  %v98 = vunpack.c.l.b16 %v34
  %v99 = vunpack.c.l.b16 %v35
  %v100 = vunpack.c.l.b16 %v36
  %v101 = vunpack.c.l.b16 %v37
  %v102 = vunpack.c.l.b16 %v38
  %v103 = vunpack.c.l.b16 %v39
  %v104 = vunpack.c.l.b16 %v40
  %v105 = vpack.c.b16 %v98, %v97
  %v106 = vpack.c.b16 %v100, %v99
  %v107 = vpack.c.b16 %v102, %v101
  %v108 = vpack.c.b16 %v104, %v103
  %v111 = vunpack.c.l.b16 %v31
  %v112 = vunpack.c.h.b16 %v31
  %v113 = vunpack.c.l.b16 %v32
  %v114 = vunpack.c.h.b16 %v32
  %v115 = vpack.c.b16 %v113, %v111
  %v116 = vpack.c.b16 %v114, %v112
  %vm119 = vcmask 130048
  %v121 = vsel %vm119, %v105, 0
  %v124 = vsel %vm119, %v106, 0
  %v127 = vsel %vm119, %v107, 0
  %v130 = vsel %vm119, %v108, 0
  %132 = vmatprep.subr.bf16.mxu0 %v116
  %133 = vmatpush1.bf16.msra.mxu0 %v115
  %134 = vmatprep.subr.bf16.mxu0 0
  %135 = vmatpush1.bf16.msra.mxu0 0
  %136 = vmatprep.subr.bf16.mxu0 0
  %137 = vmatpush1.bf16.msra.mxu0 0
  %138 = vmatprep.subr.bf16.mxu0 0
  %139 = vmatpush1.bf16.msra.mxu0 0
  %140 = vmatprep.subr.bf16.mxu0 0
  %141 = vmatpush1.bf16.msra.mxu0 0
  %142 = vmatprep.subr.bf16.mxu0 0
  %143 = vmatpush1.bf16.msra.mxu0 0
  %144 = vmatprep.subr.bf16.mxu0 0
  %145 = vmatpush1.bf16.msra.mxu0 0
  %146 = vmatprep.subr.bf16.mxu0 0
  %147 = vmatpush1.bf16.msra.mxu0 0
  %148 = vmatprep.subr.bf16.mxu0 0
  %149 = vmatpush1.bf16.msra.mxu0 0
  %150 = vmatprep.subr.bf16.mxu0 0
  %151 = vmatpush1.bf16.msra.mxu0 0
  %152 = vmatprep.subr.bf16.mxu0 0
  %153 = vmatpush1.bf16.msra.mxu0 0
  %154 = vmatprep.subr.bf16.mxu0 0
  %155 = vmatpush1.bf16.msra.mxu0 0
  %156 = vmatprep.subr.bf16.mxu0 0
  %157 = vmatpush1.bf16.msra.mxu0 0
  %158 = vmatprep.subr.bf16.mxu0 0
  %159 = vmatpush1.bf16.msra.mxu0 0
  %160 = vmatprep.subr.bf16.mxu0 0
  %161 = vmatpush1.bf16.msra.mxu0 0
  %162 = vmatprep.subr.bf16.mxu0 0
  %163 = vmatpush1.bf16.msra.mxu0 0
  %164 = vmatprep.mubr.bf16.mxu0 0
  %165 = vmatmul.mubr.bf16.gmra.mrb[0].mxu0 %v121
  %v166 = vpop.f32.mrb[0].mxu0
  %v167 = vadd.f32 %v52, %v166
  %v168 = vpop.f32.mrb[0].mxu0
  %v169 = vadd.f32 %v52, %v168
  %v170 = vpop.f32.mrb[0].mxu0
  %v171 = vadd.f32 %v57, %v170
  %v172 = vpop.f32.mrb[0].mxu0
  %v173 = vadd.f32 %v57, %v172
  %174 = vmatprep.mubr.bf16.mxu0 0
  %175 = vmatmul.mubr.bf16.gmra.mrb[0].mxu0 %v124
  %v176 = vpop.f32.mrb[0].mxu0
  %v177 = vadd.f32 %v62, %v176
  %v178 = vpop.f32.mrb[0].mxu0
  %v179 = vadd.f32 %v62, %v178
  %v180 = vpop.f32.mrb[0].mxu0
  %v181 = vadd.f32 %v67, %v180
  %v182 = vpop.f32.mrb[0].mxu0
  %v183 = vadd.f32 %v67, %v182
  %184 = vmatprep.mubr.bf16.mxu0 0
  %185 = vmatmul.mubr.bf16.gmra.mrb[0].mxu0 %v127
  %v186 = vpop.f32.mrb[0].mxu0
  %v187 = vadd.f32 %v72, %v186
  %v188 = vpop.f32.mrb[0].mxu0
  %v189 = vadd.f32 %v72, %v188
  %v190 = vpop.f32.mrb[0].mxu0
  %v191 = vadd.f32 %v77, %v190
  %v192 = vpop.f32.mrb[0].mxu0
  %v193 = vadd.f32 %v77, %v192
  %194 = vmatprep.mubr.bf16.mxu0 0
  %195 = vmatmul.mubr.bf16.gmra.mrb[0].mxu0 %v130
  %v196 = vpop.f32.mrb[0].mxu0
  %v197 = vadd.f32 %v82, %v196
  %v198 = vpop.f32.mrb[0].mxu0
  %v199 = vadd.f32 %v82, %v198
  %v200 = vpop.f32.mrb[0].mxu0
  %v201 = vadd.f32 %v87, %v200
  %v202 = vpop.f32.mrb[0].mxu0
  %v203 = vadd.f32 %v87, %v202
  %204 = vdwg.mxu0
  %v205 = vmax.f32 %v167, 0.0
  %v206 = vmax.f32 %v169, 0.0
  %v207 = vmax.f32 %v171, 0.0
  %v208 = vmax.f32 %v173, 0.0
  %v209 = vmax.f32 %v177, 0.0
  %v210 = vmax.f32 %v179, 0.0
  %v211 = vmax.f32 %v181, 0.0
  %v212 = vmax.f32 %v183, 0.0
  %v213 = vmax.f32 %v187, 0.0
  %v214 = vmax.f32 %v189, 0.0
  %v215 = vmax.f32 %v191, 0.0
  %v216 = vmax.f32 %v193, 0.0
  %v217 = vmax.f32 %v197, 0.0
  %v218 = vmax.f32 %v199, 0.0
  %v219 = vmax.f32 %v201, 0.0
  %v220 = vmax.f32 %v203, 0.0
  %v221 = vld [vmem:[%s3] sm:$0xf]
  %v222 = vld [vmem:[%s3 + $0x4] sm:$0xf]
  %v223 = vld [vmem:[%s3 + $0x8] sm:$0xf]
  %v224 = vld [vmem:[%s3 + $0xc] sm:$0xf]
  %v225 = vpack.c.bf16 %v207, %v205
  %v226 = vpack.c.bf16 %v208, %v206
  %v227 = vpack.c.bf16 %v211, %v209
  %v228 = vpack.c.bf16 %v212, %v210
  %v229 = vpack.c.bf16 %v215, %v213
  %v230 = vpack.c.bf16 %v216, %v214
  %v231 = vpack.c.bf16 %v219, %v217
  %v232 = vpack.c.bf16 %v220, %v218
  %v233 = vld [vmem:[%s4] sm:$0xff]
  %v234 = vld [vmem:[%s4 + $0x8] sm:$0xff]
  %v235 = vld [vmem:[%s4 + $0x10] sm:$0xff]
  %v236 = vld [vmem:[%s4 + $0x18] sm:$0xff]
  %238 = vset.pattern.permute.xlu0 0
  %239 = vperm.xlu0 %238, %v233
  %v240 = vpop.permute.xlu0 %239
  %243 = vset.pattern.permute.xlu0 0
  %244 = vperm.xlu0 %243, %v234
  %v245 = vpop.permute.xlu0 %244
  %248 = vset.pattern.permute.xlu0 0
  %249 = vperm.xlu0 %248, %v235
  %v250 = vpop.permute.xlu0 %249
  %253 = vset.pattern.permute.xlu0 0
  %254 = vperm.xlu0 %253, %v236
  %v255 = vpop.permute.xlu0 %254
  %v261 = vunpack.c.l.b16 %v221
  %v262 = vunpack.c.l.b16 %v222
  %v263 = vunpack.c.l.b16 %v223
  %v264 = vunpack.c.l.b16 %v224
  %v265 = vpack.c.b16 %v262, %v261
  %v266 = vpack.c.b16 %v264, %v263
  %vm267 = vcmask 523264
  %v269 = vsel %vm267, %v265, 0
  %v272 = vsel %vm267, %v266, 0
  %274 = vmatprep.subr.bf16.mxu0 %v226
  %275 = vmatpush1.bf16.msra.mxu0 %v225
  %276 = vmatprep.subr.bf16.mxu0 %v228
  %277 = vmatpush1.bf16.msra.mxu0 %v227
  %278 = vmatprep.subr.bf16.mxu0 %v230
  %279 = vmatpush1.bf16.msra.mxu0 %v229
  %280 = vmatprep.subr.bf16.mxu0 %v232
  %281 = vmatpush1.bf16.msra.mxu0 %v231
  %282 = vmatprep.subr.bf16.mxu0 0
  %283 = vmatpush1.bf16.msra.mxu0 0
  %284 = vmatprep.subr.bf16.mxu0 0
  %285 = vmatpush1.bf16.msra.mxu0 0
  %286 = vmatprep.subr.bf16.mxu0 0
  %287 = vmatpush1.bf16.msra.mxu0 0
  %288 = vmatprep.subr.bf16.mxu0 0
  %289 = vmatpush1.bf16.msra.mxu0 0
  %290 = vmatprep.subr.bf16.mxu0 0
  %291 = vmatpush1.bf16.msra.mxu0 0
  %292 = vmatprep.subr.bf16.mxu0 0
  %293 = vmatpush1.bf16.msra.mxu0 0
  %294 = vmatprep.subr.bf16.mxu0 0
  %295 = vmatpush1.bf16.msra.mxu0 0
  %296 = vmatprep.subr.bf16.mxu0 0
  %297 = vmatpush1.bf16.msra.mxu0 0
  %298 = vmatprep.subr.bf16.mxu0 0
  %299 = vmatpush1.bf16.msra.mxu0 0
  %300 = vmatprep.subr.bf16.mxu0 0
  %301 = vmatpush1.bf16.msra.mxu0 0
  %302 = vmatprep.subr.bf16.mxu0 0
  %303 = vmatpush1.bf16.msra.mxu0 0
  %304 = vmatprep.subr.bf16.mxu0 0
  %305 = vmatpush1.bf16.msra.mxu0 0
  %306 = vmatprep.mubr.bf16.mxu0 0
  %307 = vmatmul.mubr.bf16.gmra.mrb[0].mxu0 %v269
  %v308 = vpop.f32.mrb[0].mxu0
  %v309 = vadd.f32 %v240, %v308
  %v310 = vpop.f32.mrb[0].mxu0
  %v311 = vadd.f32 %v240, %v310
  %v312 = vpop.f32.mrb[0].mxu0
  %v313 = vadd.f32 %v245, %v312
  %v314 = vpop.f32.mrb[0].mxu0
  %v315 = vadd.f32 %v245, %v314
  %316 = vmatprep.mubr.bf16.mxu0 0
  %317 = vmatmul.mubr.bf16.gmra.mrb[0].mxu0 %v272
  %v318 = vpop.f32.mrb[0].mxu0
  %v319 = vadd.f32 %v250, %v318
  %v320 = vpop.f32.mrb[0].mxu0
  %v321 = vadd.f32 %v250, %v320
  %v322 = vpop.f32.mrb[0].mxu0
  %v323 = vadd.f32 %v255, %v322
  %v324 = vpop.f32.mrb[0].mxu0
  %v325 = vadd.f32 %v255, %v324
  %326 = vdwg.mxu0
  %v327 = vmax.f32 %v309, 0.0
  %v328 = vmax.f32 %v311, 0.0
  %v329 = vmax.f32 %v313, 0.0
  %v330 = vmax.f32 %v315, 0.0
  %v331 = vmax.f32 %v319, 0.0
  %v332 = vmax.f32 %v321, 0.0
  %v333 = vmax.f32 %v323, 0.0
  %v334 = vmax.f32 %v325, 0.0
  %v335 = vld [vmem:[%s5] sm:$0xff]
  %v336 = vld [vmem:[%s5 + $0x8] sm:$0xff]
  %v337 = vld [vmem:[%s5 + $0x10] sm:$0xff]
  %v338 = vld [vmem:[%s5 + $0x18] sm:$0xff]
  %340 = vset.pattern.permute.xlu0 0
  %341 = vperm.xlu0 %340, %v335
  %v342 = vpop.permute.xlu0 %341
  %345 = vset.pattern.permute.xlu0 0
  %346 = vperm.xlu0 %345, %v336
  %v347 = vpop.permute.xlu0 %346
  %350 = vset.pattern.permute.xlu0 0
  %351 = vperm.xlu0 %350, %v337
  %v352 = vpop.permute.xlu0 %351
  %355 = vset.pattern.permute.xlu0 0
  %356 = vperm.xlu0 %355, %v338
  %v357 = vpop.permute.xlu0 %356
  %v359 = vmul.f32 %v327, %v342
  %v360 = vmul.f32 %v328, %v342
  %v361 = vmul.f32 %v329, %v347
  %v362 = vmul.f32 %v330, %v347
  %v363 = vmul.f32 %v331, %v352
  %v364 = vmul.f32 %v332, %v352
  %v365 = vmul.f32 %v333, %v357
  %v366 = vmul.f32 %v334, %v357
  %v367 = vadd.f32 %v359, %v361
  %v368 = vadd.f32 %v367, %v363
  %v369 = vadd.f32 %v368, %v365
  %v370 = vrot.slane %v369, 4
  %v371 = vadd.f32 %v369, %v370
  %v372 = vrot.slane %v371, 2
  %v373 = vadd.f32 %v371, %v372
  %v374 = vrot.slane %v373, 1
  %v375 = vadd.f32 %v373, %v374
  %v376 = vadd.f32 %v360, %v362
  %v377 = vadd.f32 %v376, %v364
  %v378 = vadd.f32 %v377, %v366
  %v379 = vrot.slane %v378, 4
  %v380 = vadd.f32 %v378, %v379
  %v381 = vrot.slane %v380, 2
  %v382 = vadd.f32 %v380, %v381
  %v383 = vrot.slane %v382, 1
  %v384 = vadd.f32 %v382, %v383
  %v385 = vunpack.c.l.bf16 %v31
  %v386 = vunpack.c.h.bf16 %v31
  %v387 = vunpack.c.l.bf16 %v32
  %v388 = vunpack.c.h.bf16 %v32
  %v389 = vld [vmem:[%s6] sm:$0xff]
  %v390 = vld [vmem:[%s6 + $0x8] sm:$0xff]
  %392 = vset.pattern.permute.xlu0 0
  %393 = vperm.xlu0 %392, %v389
  %v394 = vpop.permute.xlu0 %393
  %397 = vset.pattern.permute.xlu0 0
  %398 = vperm.xlu0 %397, %v390
  %v399 = vpop.permute.xlu0 %398
  %v401 = vmul.f32 %v385, %v394
  %v402 = vmul.f32 %v386, %v394
  %v403 = vmul.f32 %v387, %v399
  %v404 = vmul.f32 %v388, %v399
  %v405 = vadd.f32 %v401, %v403
  %v406 = vrot.slane %v405, 4
  %v407 = vadd.f32 %v405, %v406
  %v408 = vrot.slane %v407, 2
  %v409 = vadd.f32 %v407, %v408
  %v410 = vrot.slane %v409, 1
  %v411 = vadd.f32 %v409, %v410
  %v412 = vadd.f32 %v402, %v404
  %v413 = vrot.slane %v412, 4
  %v414 = vadd.f32 %v412, %v413
  %v415 = vrot.slane %v414, 2
  %v416 = vadd.f32 %v414, %v415
  %v417 = vrot.slane %v416, 1
  %v418 = vadd.f32 %v416, %v417
  %v419 = vadd.f32 %v375, %v411
  %v420 = vadd.f32 %v384, %v418
  %s421 = sld [smem:[#allocation2]]
  %v422 = vstv %s421
  %v423 = vadd.f32 %v419, %v422
  %v424 = vadd.f32 %v420, %v422
  %v427 = vcombine.low %v423, %v424
  %v429 = vunpack.c.l.s4 1966171168
  %v430 = vunpack.c.0.s8 %v429
  %v431 = vlaneseq
  %v432 = vshrl.u32 %v431, 7
  %v433 = vsub.s32 %v430, %v432
  %v434 = vrot.slane %v427, %v433
  %v436 = vunpack.c.l.s4 1966171168
  %v437 = vunpack.c.0.s8 %v436
  %v438 = vlaneseq
  %v439 = vshrl.u32 %v438, 7
  %v440 = vsub.s32 %v437, %v439
  %v441 = vrot.slane %v434, %v440
  %v443 = vlaneseq
  %vm444 = vcmp.ge.s32.totalorder %v443, 0
  %vm445 = vcmp.lt.s32.totalorder %v443, 256
  %vm446 = vmand %vm444, %vm445
  %447 = vst.msk [vmem:[%s8] sm:$0x3] %vm446, %v441
  // Predicated region
  $region34: #{wide_and_deep_forward.1} parent=0 // pred_check
    _
  $region35: #{wide_and_deep_forward.1} parent=0 // pred_check_branch
    %449 = sbr.rel (0) target = $region37
  $region36: #{wide_and_deep_forward.1} parent=0 // pred_region
    _
  $region37: #{wide_and_deep_forward.1} parent=0 // pred_fallthru
    _
  // Predicated region
  $region38: #{wide_and_deep_forward.1} parent=0 // pred_check
    _
  $region39: #{wide_and_deep_forward.1} parent=0 // pred_check_branch
    %451 = sbr.rel (0) target = $region41
  $region40: #{wide_and_deep_forward.1} parent=0 // pred_region
    _
  $region41: #{wide_and_deep_forward.1} parent=0 // pred_fallthru
    _

</llo_original>
